<compile_context>
chip_gen: v7x
topology: tpu7x:2x2x1
jax: 0.10.0
libtpu: 0.0.40
codegen_flags: <defaults>
</compile_context>

<pallas_src>
import jax
import jax.numpy as jnp
from jax.experimental import pallas as pl
from jax.experimental.pallas import tpu as pltpu


def _round_up(x, m):
    return ((x + m - 1) // m) * m


# --------------------------------------------------------------------------- #
# One-time parameter preparation (off the hot path).
# --------------------------------------------------------------------------- #
def prepare_params(w1, b1, w2, b2):
    """Call ONCE (at init) and reuse the result for every forward call.

    w1: (D_in, H), b1: (H,) or (1, H), w2: (H, D_out), b2: (D_out,) or (1, D_out).
    - H is zero-padded to a multiple of 128 (exact: relu(x@0 + 0) = 0 contributes 0).
    - D_out is padded to a multiple of 128 lanes; padded logits get a -1e30 f32
      bias so exp underflows to 0 and softmax over the real lanes is unchanged.
      (Keep the logit path in f32: in bf16 -1e30 would become -inf and can NaN.)
    - Weights are cast to bf16 for the MXU; biases stay f32.
    """
    D_in, H = w1.shape
    _, D_out = w2.shape
    H_p = _round_up(H, 128)
    D_out_p = _round_up(D_out, 128)

    w1_p = jnp.pad(w1.astype(jnp.float32), ((0, 0), (0, H_p - H))).astype(jnp.bfloat16)
    b1_p = jnp.pad(b1.reshape(1, -1).astype(jnp.float32), ((0, 0), (0, H_p - H)))
    w2_p = jnp.pad(w2.astype(jnp.float32),
                   ((0, H_p - H), (0, D_out_p - D_out))).astype(jnp.bfloat16)
    b2_p = jnp.pad(b2.reshape(1, -1).astype(jnp.float32),
                   ((0, 0), (0, D_out_p - D_out)),
                   constant_values=-1e30)

    return {"w1": w1_p, "b1": b1_p, "w2": w2_p, "b2": b2_p,
            "D_in": D_in, "H": H, "D_out": D_out}


# --------------------------------------------------------------------------- #
# Kernel: grid = (batch row tiles [parallel], H slices [arbitrary reduction]).
# --------------------------------------------------------------------------- #
def _two_layer_net_kernel(x_ref, w1_ref, b1_ref, w2_ref, b2_ref, out_ref, acc_ref):
    k = pl.program_id(1)

    @pl.when(k == 0)
    def _init():
        acc_ref[...] = jnp.zeros_like(acc_ref)

    # Linear1: cast x to bf16 in-kernel (HBM only ever sees the f32 x once),
    # accumulate f32 on the MXU, add bias, ReLU.
    x_bf = x_ref[...].astype(jnp.bfloat16)
    h = jnp.dot(x_bf, w1_ref[...], preferred_element_type=jnp.float32)
    h = jnp.maximum(h + b1_ref[...], 0.0)                      # (tm, hk) f32

    # Linear2 partial product for this H slice, accumulated into f32 scratch.
    acc_ref[...] += jnp.dot(h.astype(jnp.bfloat16), w2_ref[...],
                            preferred_element_type=jnp.float32)

    @pl.when(k == pl.num_programs(1) - 1)
    def _finalize():
        # Padded output lanes carry a -1e30 bias (f32) -> exp underflows to 0,
        # so the softmax over the real lanes is mathematically unchanged.
        y = acc_ref[...] + b2_ref[...]
        y_max = jnp.max(y, axis=-1, keepdims=True)
        e = jnp.exp(y - y_max)
        denom = jnp.sum(e, axis=-1, keepdims=True)
        # Exact divide (NOT approx reciprocal): guarantees rows sum to 1 to f32
        # rounding; this was the source of the previous normalization failure.
        out_ref[...] = (e / denom).astype(out_ref.dtype)


# --------------------------------------------------------------------------- #
# Generation-aware sizing.
# --------------------------------------------------------------------------- #
def _vmem_budget_bytes():
    cap = 64 << 20                       # conservative default (v7x per-TC VMEM)
    try:
        info = pltpu.get_tpu_info()
        cap = int(getattr(info, "vmem_capacity_bytes", cap))
    except Exception:
        pass
    # ~0.75x physical, clamped: ~48 MiB on v7x, ~96-100 MiB on v5e/v6e.
    return int(min(max((cap * 3) // 4, 16 << 20), 100 << 20))


def _choose_tiling(N, D_in, H_p, D_out_p, out_bytes, budget):
    """Pick (tm, hk): batch tile rows and H slice width, both VMEM-budget aware."""
    xb, wb = 4, 2                         # f32 x at the boundary, bf16 weights

    def weight_bytes(hk):                 # conservative: assume double-buffered
        return 2 * (D_in * hk * wb + hk * D_out_p * wb + hk * 4 + D_out_p * 4)

    def row_bytes(hk):                    # per batch row: 2x x tile, 2x out tile,
        return (2 * D_in * xb             # acc scratch, f32 h / softmax temps
                + 2 * D_out_p * out_bytes
                + D_out_p * 4 + hk * 4 + 2 * D_out_p * 4)

    units = H_p // 128
    nk, hk = 1, H_p
    tm_max = 0
    while True:
        rem = budget - weight_bytes(hk)
        tm_max = rem // row_bytes(hk) if rem > 0 else 0
        if tm_max >= 8 or hk == 128:
            break
        nk += 1
        while units % nk != 0:            # keep hk a 128-multiple divisor of H_p
            nk += 1
        hk = H_p // nk

    # 512-row tiles hit ~85%+ of the HBM roofline (tile sweep); never exceed the
    # batch, always a multiple of 8 sublanes, never exceed the VMEM budget.
    tm = max(8, min(512, (int(tm_max) // 8) * 8, _round_up(N, 8)))
    return tm, hk


# --------------------------------------------------------------------------- #
# pallas_call builder + wrapper.
# --------------------------------------------------------------------------- #
def _forward_call(N, D_in, H_p, D_out_p, tm, hk, out_dtype, vmem_limit, single_buffer):
    nk = H_p // hk
    grid = (pl.cdiv(N, tm), nk)

    def _spec(shape, index_map, constant):
        # Constant-index blocks don't need double buffers -> Buffered(1).
        if constant and single_buffer:
            return pl.BlockSpec(shape, index_map, pipeline_mode=pl.Buffered(1))
        return pl.BlockSpec(shape, index_map)

    in_specs = [
        _spec((tm, D_in),    lambda i, k: (i, 0), constant=False),      # x row tile
        _spec((D_in, hk),    lambda i, k: (0, k), constant=(nk == 1)),  # W1
        _spec((1, hk),       lambda i, k: (0, k), constant=(nk == 1)),  # b1
        _spec((hk, D_out_p), lambda i, k: (k, 0), constant=(nk == 1)),  # W2
        _spec((1, D_out_p),  lambda i, k: (0, 0), constant=True),       # b2
    ]
    out_spec = pl.BlockSpec((tm, D_out_p), lambda i, k: (i, 0))

    flops = 2 * N * (D_in * H_p + H_p * D_out_p)
    transcendentals = N * D_out_p
    bytes_accessed = (N * D_in * 4 + D_in * H_p * 2 + H_p * D_out_p * 2
                      + (H_p + D_out_p) * 4
                      + N * D_out_p * jnp.dtype(out_dtype).itemsize)

    return pl.pallas_call(
        _two_layer_net_kernel,
        out_shape=jax.ShapeDtypeStruct((N, D_out_p), out_dtype),
        grid_spec=pltpu.PrefetchScalarGridSpec(
            num_scalar_prefetch=0,
            grid=grid,
            in_specs=in_specs,
            out_specs=out_spec,
            scratch_shapes=[pltpu.VMEM((tm, D_out_p), jnp.float32)],
        ),
        compiler_params=pltpu.CompilerParams(
            # Batch tiles independent, H axis is a reduction into the scratch acc.
            # (v7x: verify both TCs are busy; else switch to pltpu.CORE_PARALLEL.)
            dimension_semantics=("parallel", "arbitrary"),
            vmem_limit_bytes=int(vmem_limit),
        ),
        cost_estimate=pl.CostEstimate(flops=int(flops),
                                      transcendentals=int(transcendentals),
                                      bytes_accessed=int(bytes_accessed)),
    )


def two_layer_net(x, params, *, out_dtype=jnp.float32):
    """x: (N, D_in) f32 (or bf16); params: output of prepare_params()."""
    w1, b1, w2, b2 = params["w1"], params["b1"], params["w2"], params["b2"]
    N, D_in = x.shape
    H_p = w1.shape[1]
    D_out_p = w2.shape[1]
    D_out = params["D_out"]

    budget = _vmem_budget_bytes()
    tm, hk = _choose_tiling(N, D_in, H_p, D_out_p, jnp.dtype(out_dtype).itemsize, budget)

    try:
        out = _forward_call(N, D_in, H_p, D_out_p, tm, hk, out_dtype, budget,
                            single_buffer=True)(x, w1, b1, w2, b2)
    except Exception:
        # pl.Buffered(1) unsupported on this jax/backend -> default buffering.
        out = _forward_call(N, D_in, H_p, D_out_p, tm, hk, out_dtype, budget,
                            single_buffer=False)(x, w1, b1, w2, b2)

    # Only the lane padding of the output needs stripping (no row padding used).
    return out if D_out_p == D_out else out[:, :D_out]


def init_params(key, D_in, H, D_out):
    """torch.nn.Linear-style init: U(-1/sqrt(fan_in), +1/sqrt(fan_in)); weights
    stored pre-transposed as (in_features, out_features)."""
    k1, k2, k3, k4 = jax.random.split(key, 4)
    bound1 = 1.0 / jnp.sqrt(D_in)
    bound2 = 1.0 / jnp.sqrt(H)
    w1 = jax.random.uniform(k1, (D_in, H), jnp.float32, -bound1, bound1)
    b1 = jax.random.uniform(k2, (1, H), jnp.float32, -bound1, bound1)
    w2 = jax.random.uniform(k3, (H, D_out), jnp.float32, -bound2, bound2)
    b2 = jax.random.uniform(k4, (1, D_out), jnp.float32, -bound2, bound2)
    return w1, b1, w2, b2


if __name__ == "__main__":
    # Small shapes consistent with the module's forward (2-D input to Linear).
    N, D_in, H, D_out = 8, 32, 64, 16

    key = jax.random.PRNGKey(0)
    kx, kp = jax.random.split(key)
    x = jax.random.normal(kx, (N, D_in), jnp.float32)
    w1, b1, w2, b2 = init_params(kp, D_in, H, D_out)

    # One-time prep (hoisted off the per-call hot path per the perf review).
    params = prepare_params(w1, b1, w2, b2)

    out = two_layer_net(x, params)
    out = jax.block_until_ready(out)

    # Pure-JAX f32 reference of the same math (Linear -> ReLU -> Linear -> Softmax dim=1).
    h_ref = jnp.maximum(x @ w1 + b1, 0.0)
    ref = jax.nn.softmax(h_ref @ w2 + b2, axis=-1)

    assert out.shape == (N, D_out)
    # bf16 MXU operands -> loosened elementwise tolerance.
    assert jnp.allclose(out, ref, atol=2e-2, rtol=2e-2)
    # Exact row normalization (exact divide in the kernel).
    assert jnp.allclose(jnp.sum(out, axis=-1), 1.0, atol=1e-3)

    print("KERNEL_OK")
</pallas_src>

<mosaic_0001>
module attributes {stable_mosaic.version = 11 : i64} {
  func.func @_two_layer_net_kernel(%arg0: i32, %arg1: i32, %arg2: memref<8x32xf32, #tpu.memory_space<vmem>>, %arg3: memref<32x128xbf16, #tpu.memory_space<vmem>>, %arg4: memref<1x128xf32, #tpu.memory_space<vmem>>, %arg5: memref<128x128xbf16, #tpu.memory_space<vmem>>, %arg6: memref<1x128xf32, #tpu.memory_space<vmem>>, %arg7: memref<8x128xf32, #tpu.memory_space<vmem>>, %arg8: memref<8x128xf32, #tpu.memory_space<vmem>>) attributes {dimension_semantics = [#tpu.dimension_semantics<parallel>, #tpu.dimension_semantics<arbitrary>], iteration_bounds = array<i64: 1, 1>, scalar_prefetch = 0 : i64, scratch_operands = 1 : i64, tpu.core_type = #tpu.core_type<tc>, window_params = [{transform_indices = @transform_0, window_bounds = array<i64: 8, 32>}, {pipeline_mode = #tpu.pipeline_mode<synchronous>, transform_indices = @transform_1, window_bounds = array<i64: 32, 128>}, {pipeline_mode = #tpu.pipeline_mode<synchronous>, transform_indices = @transform_2, window_bounds = array<i64: 1, 128>}, {pipeline_mode = #tpu.pipeline_mode<synchronous>, transform_indices = @transform_3, window_bounds = array<i64: 128, 128>}, {pipeline_mode = #tpu.pipeline_mode<synchronous>, transform_indices = @transform_4, window_bounds = array<i64: 1, 128>}, {transform_indices = @transform_5, window_bounds = array<i64: 8, 128>}]} {
    %c0_i32 = arith.constant 0 : i32
    %0 = arith.cmpi eq, %arg1, %c0_i32 : i32
    %1 = arith.extui %0 : i1 to i32
    %c0_i32_0 = arith.constant 0 : i32
    %2 = arith.cmpi ne, %1, %c0_i32_0 : i32
    scf.if %2 {
      %cst_16 = arith.constant 0.000000e+00 : f32
      %21 = vector.broadcast %cst_16 : f32 to vector<8x128xf32>
      %c0_17 = arith.constant 0 : index
      %c0_18 = arith.constant 0 : index
      %22 = vector.load %arg8[%c0_17, %c0_18] : memref<8x128xf32, #tpu.memory_space<vmem>>, vector<8x128xf32>
      tpu.vector_store %arg8[%c0_17, %c0_18], %21 {strides = array<i32>} : memref<8x128xf32, #tpu.memory_space<vmem>>, vector<8x128xf32>,
    } else {
    }
    %c0 = arith.constant 0 : index
    %c0_1 = arith.constant 0 : index
    %3 = vector.load %arg2[%c0, %c0_1] : memref<8x32xf32, #tpu.memory_space<vmem>>, vector<8x32xf32>
    %4 = arith.truncf %3 : vector<8x32xf32> to vector<8x32xbf16>
    %c0_2 = arith.constant 0 : index
    %c0_3 = arith.constant 0 : index
    %5 = vector.load %arg3[%c0_2, %c0_3] : memref<32x128xbf16, #tpu.memory_space<vmem>>, vector<32x128xbf16>
    %cst = arith.constant dense<0.000000e+00> : vector<8x128xf32>
    %6 = tpu.matmul %4, %5, %cst {dimension_numbers = #tpu.dot_dimension_numbers<[1], [0], [0], [1], [0, 0, 1, 1], [], []>} : vector<8x32xbf16>, vector<32x128xbf16>, vector<8x128xf32> -> vector<8x128xf32>
    %c0_4 = arith.constant 0 : index
    %c0_5 = arith.constant 0 : index
    %7 = vector.load %arg4[%c0_4, %c0_5] : memref<1x128xf32, #tpu.memory_space<vmem>>, vector<1x128xf32>
    %8 = vector.broadcast %7 : vector<1x128xf32> to vector<8x128xf32>
    %9 = arith.addf %6, %8 : vector<8x128xf32>
    %cst_6 = arith.constant 0.000000e+00 : f32
    %10 = vector.broadcast %cst_6 : f32 to vector<8x128xf32>
    %11 = arith.maximumf %9, %10 : vector<8x128xf32>
    %c0_7 = arith.constant 0 : index
    %c0_8 = arith.constant 0 : index
    %12 = vector.load %arg8[%c0_7, %c0_8] : memref<8x128xf32, #tpu.memory_space<vmem>>, vector<8x128xf32>
    %13 = arith.truncf %11 : vector<8x128xf32> to vector<8x128xbf16>
    %c0_9 = arith.constant 0 : index
    %c0_10 = arith.constant 0 : index
    %14 = vector.load %arg5[%c0_9, %c0_10] : memref<128x128xbf16, #tpu.memory_space<vmem>>, vector<128x128xbf16>
    %cst_11 = arith.constant dense<0.000000e+00> : vector<8x128xf32>
    %15 = tpu.matmul %13, %14, %cst_11 {dimension_numbers = #tpu.dot_dimension_numbers<[1], [0], [0], [1], [0, 0, 1, 1], [], []>} : vector<8x128xbf16>, vector<128x128xbf16>, vector<8x128xf32> -> vector<8x128xf32>
    %16 = arith.addf %12, %15 : vector<8x128xf32>
    %c0_12 = arith.constant 0 : index
    %c0_13 = arith.constant 0 : index
    %17 = vector.load %arg8[%c0_12, %c0_13] : memref<8x128xf32, #tpu.memory_space<vmem>>, vector<8x128xf32>
    tpu.vector_store %arg8[%c0_12, %c0_13], %16 {strides = array<i32>} : memref<8x128xf32, #tpu.memory_space<vmem>>, vector<8x128xf32>,
    %c0_i32_14 = arith.constant 0 : i32
    %18 = arith.cmpi eq, %arg1, %c0_i32_14 : i32
    %19 = arith.extui %18 : i1 to i32
    %c0_i32_15 = arith.constant 0 : i32
    %20 = arith.cmpi ne, %19, %c0_i32_15 : i32
    scf.if %20 {
      %c0_16 = arith.constant 0 : index
      %c0_17 = arith.constant 0 : index
      %21 = vector.load %arg8[%c0_16, %c0_17] : memref<8x128xf32, #tpu.memory_space<vmem>>, vector<8x128xf32>
      %c0_18 = arith.constant 0 : index
      %c0_19 = arith.constant 0 : index
      %22 = vector.load %arg6[%c0_18, %c0_19] : memref<1x128xf32, #tpu.memory_space<vmem>>, vector<1x128xf32>
      %23 = vector.broadcast %22 : vector<1x128xf32> to vector<8x128xf32>
      %24 = arith.addf %21, %23 : vector<8x128xf32>
      %cst_20 = arith.constant dense<0xFF800000> : vector<8xf32>
      %25 = vector.multi_reduction <maximumf>, %24, %cst_20 [1] : vector<8x128xf32> to vector<8xf32>
      %26 = vector.shape_cast %25 : vector<8xf32> to vector<8x1xf32>
      %27 = vector.broadcast %26 : vector<8x1xf32> to vector<8x128xf32>
      %28 = arith.subf %24, %27 : vector<8x128xf32>
      %29 = math.exp %28 : vector<8x128xf32>
      %cst_21 = arith.constant dense<0.000000e+00> : vector<8xf32>
      %30 = vector.multi_reduction <add>, %29, %cst_21 [1] : vector<8x128xf32> to vector<8xf32>
      %31 = vector.shape_cast %30 : vector<8xf32> to vector<8x1xf32>
      %32 = vector.broadcast %31 : vector<8x1xf32> to vector<8x128xf32>
      %33 = arith.divf %29, %32 : vector<8x128xf32>
      %c0_22 = arith.constant 0 : index
      %c0_23 = arith.constant 0 : index
      %34 = vector.load %arg7[%c0_22, %c0_23] : memref<8x128xf32, #tpu.memory_space<vmem>>, vector<8x128xf32>
      tpu.vector_store %arg7[%c0_22, %c0_23], %33 {strides = array<i32>} : memref<8x128xf32, #tpu.memory_space<vmem>>, vector<8x128xf32>,
    } else {
    }
    return
  }
  func.func @transform_0(%arg0: i32, %arg1: i32) -> (i32, i32) {
    %c0_i32 = arith.constant 0 : i32
    %c0_i32_0 = arith.constant 0 : i32
    return %arg0, %c0_i32 : i32, i32
  }
  func.func @transform_1(%arg0: i32, %arg1: i32) -> (i32, i32) {
    %c0_i32 = arith.constant 0 : i32
    %c0_i32_0 = arith.constant 0 : i32
    return %c0_i32, %arg1 : i32, i32
  }
  func.func @transform_2(%arg0: i32, %arg1: i32) -> (i32, i32) {
    %c0_i32 = arith.constant 0 : i32
    %c0_i32_0 = arith.constant 0 : i32
    return %c0_i32, %arg1 : i32, i32
  }
  func.func @transform_3(%arg0: i32, %arg1: i32) -> (i32, i32) {
    %c0_i32 = arith.constant 0 : i32
    %c0_i32_0 = arith.constant 0 : i32
    return %arg1, %c0_i32 : i32, i32
  }
  func.func @transform_4(%arg0: i32, %arg1: i32) -> (i32, i32) {
    %c0_i32 = arith.constant 0 : i32
    %c0_i32_0 = arith.constant 0 : i32
    %c0_i32_1 = arith.constant 0 : i32
    return %c0_i32, %c0_i32_0 : i32, i32
  }
  func.func @transform_5(%arg0: i32, %arg1: i32) -> (i32, i32) {
    %c0_i32 = arith.constant 0 : i32
    %c0_i32_0 = arith.constant 0 : i32
    return %arg0, %c0_i32 : i32, i32
  }
}

module attributes {stable_mosaic.version = 11 : i64} {
  func.func @_two_layer_net_kernel(%arg0: i32, %arg1: i32, %arg2: memref<8x32xf32, #tpu.memory_space<vmem>>, %arg3: memref<32x128xbf16, #tpu.memory_space<vmem>>, %arg4: memref<1x128xf32, #tpu.memory_space<vmem>>, %arg5: memref<128x128xbf16, #tpu.memory_space<vmem>>, %arg6: memref<1x128xf32, #tpu.memory_space<vmem>>, %arg7: memref<8x128xf32, #tpu.memory_space<vmem>>, %arg8: memref<8x128xf32, #tpu.memory_space<vmem>>) attributes {dimension_semantics = [#tpu.dimension_semantics<parallel>, #tpu.dimension_semantics<arbitrary>], iteration_bounds = array<i64: 1, 1>, scalar_prefetch = 0 : i64, scratch_operands = 1 : i64, tpu.core_type = #tpu.core_type<tc>, window_params = [{transform_indices = @transform_0, window_bounds = array<i64: 8, 32>}, {transform_indices = @transform_1, window_bounds = array<i64: 32, 128>}, {transform_indices = @transform_2, window_bounds = array<i64: 1, 128>}, {transform_indices = @transform_3, window_bounds = array<i64: 128, 128>}, {pipeline_mode = #tpu.pipeline_mode<synchronous>, transform_indices = @transform_4, window_bounds = array<i64: 1, 128>}, {transform_indices = @transform_5, window_bounds = array<i64: 8, 128>}]} {
    %c0_i32 = arith.constant 0 : i32
    %0 = arith.cmpi eq, %arg1, %c0_i32 : i32
    %1 = arith.extui %0 : i1 to i32
    %c0_i32_0 = arith.constant 0 : i32
    %2 = arith.cmpi ne, %1, %c0_i32_0 : i32
    scf.if %2 {
      %cst_16 = arith.constant 0.000000e+00 : f32
      %21 = vector.broadcast %cst_16 : f32 to vector<8x128xf32>
      %c0_17 = arith.constant 0 : index
      %c0_18 = arith.constant 0 : index
      %22 = vector.load %arg8[%c0_17, %c0_18] : memref<8x128xf32, #tpu.memory_space<vmem>>, vector<8x128xf32>
      tpu.vector_store %arg8[%c0_17, %c0_18], %21 {strides = array<i32>} : memref<8x128xf32, #tpu.memory_space<vmem>>, vector<8x128xf32>,
    } else {
    }
    %c0 = arith.constant 0 : index
    %c0_1 = arith.constant 0 : index
    %3 = vector.load %arg2[%c0, %c0_1] : memref<8x32xf32, #tpu.memory_space<vmem>>, vector<8x32xf32>
    %4 = arith.truncf %3 : vector<8x32xf32> to vector<8x32xbf16>
    %c0_2 = arith.constant 0 : index
    %c0_3 = arith.constant 0 : index
    %5 = vector.load %arg3[%c0_2, %c0_3] : memref<32x128xbf16, #tpu.memory_space<vmem>>, vector<32x128xbf16>
    %cst = arith.constant dense<0.000000e+00> : vector<8x128xf32>
    %6 = tpu.matmul %4, %5, %cst {dimension_numbers = #tpu.dot_dimension_numbers<[1], [0], [0], [1], [0, 0, 1, 1], [], []>} : vector<8x32xbf16>, vector<32x128xbf16>, vector<8x128xf32> -> vector<8x128xf32>
    %c0_4 = arith.constant 0 : index
    %c0_5 = arith.constant 0 : index
    %7 = vector.load %arg4[%c0_4, %c0_5] : memref<1x128xf32, #tpu.memory_space<vmem>>, vector<1x128xf32>
    %8 = vector.broadcast %7 : vector<1x128xf32> to vector<8x128xf32>
    %9 = arith.addf %6, %8 : vector<8x128xf32>
    %cst_6 = arith.constant 0.000000e+00 : f32
    %10 = vector.broadcast %cst_6 : f32 to vector<8x128xf32>
    %11 = arith.maximumf %9, %10 : vector<8x128xf32>
    %c0_7 = arith.constant 0 : index
    %c0_8 = arith.constant 0 : index
    %12 = vector.load %arg8[%c0_7, %c0_8] : memref<8x128xf32, #tpu.memory_space<vmem>>, vector<8x128xf32>
    %13 = arith.truncf %11 : vector<8x128xf32> to vector<8x128xbf16>
    %c0_9 = arith.constant 0 : index
    %c0_10 = arith.constant 0 : index
    %14 = vector.load %arg5[%c0_9, %c0_10] : memref<128x128xbf16, #tpu.memory_space<vmem>>, vector<128x128xbf16>
    %cst_11 = arith.constant dense<0.000000e+00> : vector<8x128xf32>
    %15 = tpu.matmul %13, %14, %cst_11 {dimension_numbers = #tpu.dot_dimension_numbers<[1], [0], [0], [1], [0, 0, 1, 1], [], []>} : vector<8x128xbf16>, vector<128x128xbf16>, vector<8x128xf32> -> vector<8x128xf32>
    %16 = arith.addf %12, %15 : vector<8x128xf32>
    %c0_12 = arith.constant 0 : index
    %c0_13 = arith.constant 0 : index
    %17 = vector.load %arg8[%c0_12, %c0_13] : memref<8x128xf32, #tpu.memory_space<vmem>>, vector<8x128xf32>
    tpu.vector_store %arg8[%c0_12, %c0_13], %16 {strides = array<i32>} : memref<8x128xf32, #tpu.memory_space<vmem>>, vector<8x128xf32>,
    %c0_i32_14 = arith.constant 0 : i32
    %18 = arith.cmpi eq, %arg1, %c0_i32_14 : i32
    %19 = arith.extui %18 : i1 to i32
    %c0_i32_15 = arith.constant 0 : i32
    %20 = arith.cmpi ne, %19, %c0_i32_15 : i32
    scf.if %20 {
      %c0_16 = arith.constant 0 : index
      %c0_17 = arith.constant 0 : index
      %21 = vector.load %arg8[%c0_16, %c0_17] : memref<8x128xf32, #tpu.memory_space<vmem>>, vector<8x128xf32>
      %c0_18 = arith.constant 0 : index
      %c0_19 = arith.constant 0 : index
      %22 = vector.load %arg6[%c0_18, %c0_19] : memref<1x128xf32, #tpu.memory_space<vmem>>, vector<1x128xf32>
      %23 = vector.broadcast %22 : vector<1x128xf32> to vector<8x128xf32>
      %24 = arith.addf %21, %23 : vector<8x128xf32>
      %cst_20 = arith.constant dense<0xFF800000> : vector<8xf32>
      %25 = vector.multi_reduction <maximumf>, %24, %cst_20 [1] : vector<8x128xf32> to vector<8xf32>
      %26 = vector.shape_cast %25 : vector<8xf32> to vector<8x1xf32>
      %27 = vector.broadcast %26 : vector<8x1xf32> to vector<8x128xf32>
      %28 = arith.subf %24, %27 : vector<8x128xf32>
      %29 = math.exp %28 : vector<8x128xf32>
      %cst_21 = arith.constant dense<0.000000e+00> : vector<8xf32>
      %30 = vector.multi_reduction <add>, %29, %cst_21 [1] : vector<8x128xf32> to vector<8xf32>
      %31 = vector.shape_cast %30 : vector<8xf32> to vector<8x1xf32>
      %32 = vector.broadcast %31 : vector<8x1xf32> to vector<8x128xf32>
      %33 = arith.divf %29, %32 : vector<8x128xf32>
      %c0_22 = arith.constant 0 : index
      %c0_23 = arith.constant 0 : index
      %34 = vector.load %arg7[%c0_22, %c0_23] : memref<8x128xf32, #tpu.memory_space<vmem>>, vector<8x128xf32>
      tpu.vector_store %arg7[%c0_22, %c0_23], %33 {strides = array<i32>} : memref<8x128xf32, #tpu.memory_space<vmem>>, vector<8x128xf32>,
    } else {
    }
    return
  }
  func.func @transform_0(%arg0: i32, %arg1: i32) -> (i32, i32) {
    %c0_i32 = arith.constant 0 : i32
    %c0_i32_0 = arith.constant 0 : i32
    return %arg0, %c0_i32 : i32, i32
  }
  func.func @transform_1(%arg0: i32, %arg1: i32) -> (i32, i32) {
    %c0_i32 = arith.constant 0 : i32
    %c0_i32_0 = arith.constant 0 : i32
    return %c0_i32, %arg1 : i32, i32
  }
  func.func @transform_2(%arg0: i32, %arg1: i32) -> (i32, i32) {
    %c0_i32 = arith.constant 0 : i32
    %c0_i32_0 = arith.constant 0 : i32
    return %c0_i32, %arg1 : i32, i32
  }
  func.func @transform_3(%arg0: i32, %arg1: i32) -> (i32, i32) {
    %c0_i32 = arith.constant 0 : i32
    %c0_i32_0 = arith.constant 0 : i32
    return %arg1, %c0_i32 : i32, i32
  }
  func.func @transform_4(%arg0: i32, %arg1: i32) -> (i32, i32) {
    %c0_i32 = arith.constant 0 : i32
    %c0_i32_0 = arith.constant 0 : i32
    %c0_i32_1 = arith.constant 0 : i32
    return %c0_i32, %c0_i32_0 : i32, i32
  }
  func.func @transform_5(%arg0: i32, %arg1: i32) -> (i32, i32) {
    %c0_i32 = arith.constant 0 : i32
    %c0_i32_0 = arith.constant 0 : i32
    return %arg0, %c0_i32 : i32, i32
  }
}

</mosaic_0001>

<llo_original>
// kernel: tpu_custom_call.1
$region0: #{tpu_custom_call.1}
  #allocation0 [shape = 'u32[]', space=smem, size = 0x4, offset = 0x4, fixed_abs, tag = 'smem constant byte address 0x4 - core index']
  #allocation1 [shape = 'u32[144,128]{1,0:T(1,128)}', space=vmem, size = 0x12000, scoped, tag = 'internal scratch']
  #allocation2 [shape = 'f32[8,128]{1,0:T(8,128)}', space=vmem, size = 0x1000, scoped, tag = 'scratch operand']
  %s0 = inlined_call_operand.hbm [shape: f32[8,32], index: 0, kind: input, shape index: {}]
  %s1 = inlined_call_operand.hbm [shape: bf16[32,128], index: 1, kind: input, shape index: {}]
  %s2 = inlined_call_operand.vmem [shape: f32[1,128], index: 2, kind: input, shape index: {}]
  %s3 = inlined_call_operand.hbm [shape: bf16[128,128], index: 3, kind: input, shape index: {}]
  %s4 = inlined_call_operand.vmem [shape: f32[1,128], index: 4, kind: input, shape index: {}]
  %s5 = inlined_call_operand.hbm [shape: f32[8,128], index: 5, kind: output, shape index: {}]
  %s6 = sld [smem:[#allocation0]]
  $region50: #{tpu_custom_call.1} parent=0
    _
  %s8 = ssub.s32 1, %s6
  %s9 = scalar_select 0, %s8, %s6
  $region1: #{tpu_custom_call.1} parent=0
    #allocation3 [shape = 'u8[4096]{0}', space=vmem, size = 0x1000, scoped, tag = 'input window, operand 0, single buffered']
    #allocation4 [shape = 's32[1]{0}', space=sflag, size = 0x4, scoped, tag = 'scoped memory for tpu_custom_call.1']
    #allocation5 [shape = 's32[1]{0}', space=sflag, size = 0x4, scoped, tag = 'scoped memory for tpu_custom_call.1']
    #allocation6 [shape = 'u8[8192]{0}', space=vmem, size = 0x2000, scoped, tag = 'input window, operand 1, single buffered']
    #allocation7 [shape = 's32[1]{0}', space=sflag, size = 0x4, scoped, tag = 'scoped memory for tpu_custom_call.1']
    #allocation8 [shape = 'u8[32768]{0}', space=vmem, size = 0x8000, scoped, tag = 'input window, operand 3, single buffered']
    #allocation9 [shape = 'u8[4096]{0}', space=vmem, size = 0x1000, scoped, tag = 'output window, operand 0, single buffered']
    %10 = vsyncpa [#allocation4], 0
    %11 = vsyncpa [#allocation7], 0
    %12 = vsyncpa [#allocation5], 0
    // Predicated region
    $region2: #{tpu_custom_call.1} parent=1 // pred_check
      _
    $region3: #{tpu_custom_call.1} parent=1 // pred_check_branch
      %14 = sbr.rel (0) target = $region5
    $region4: #{tpu_custom_call.1} parent=1 // pred_region
      %s16 = ssub.s32 128, 128
      %17 = vsyncadd [#allocation4], %s16
      %s19 = sshll.u32 [#allocation3], 4
      %s20 = int_to_ptr.vmem [resolvable:$true] %s19
      %22 = dma.hbm_to_vmem [thread:$0]  %s0, 128, %s20, [#allocation4]
    $region5: #{tpu_custom_call.1} parent=1 // pred_fallthru
      _
    // Predicated region
    $region6: #{tpu_custom_call.1} parent=1 // pred_check
      _
    $region7: #{tpu_custom_call.1} parent=1 // pred_check_branch
      %24 = sbr.rel (0) target = $region9
    $region8: #{tpu_custom_call.1} parent=1 // pred_region
      %s26 = ssub.s32 256, 256
      %27 = vsyncadd [#allocation7], %s26
      %s28 = sshll.u32 [#allocation6], 4
      %s29 = int_to_ptr.vmem [resolvable:$true] %s28
      %34 = dma.hbm_to_vmem [thread:$0]  %s1, 256, %s29, [#allocation7], 64, 64, 4
    $region9: #{tpu_custom_call.1} parent=1 // pred_fallthru
      _
    // Predicated region
    $region10: #{tpu_custom_call.1} parent=1 // pred_check
      _
    $region11: #{tpu_custom_call.1} parent=1 // pred_check_branch
      %36 = sbr.rel (0) target = $region13
    $region12: #{tpu_custom_call.1} parent=1 // pred_region
      _
    $region13: #{tpu_custom_call.1} parent=1 // pred_fallthru
      _
    // Predicated region
    $region14: #{tpu_custom_call.1} parent=1 // pred_check
      _
    $region15: #{tpu_custom_call.1} parent=1 // pred_check_branch
      %38 = sbr.rel (0) target = $region17
    $region16: #{tpu_custom_call.1} parent=1 // pred_region
      %s40 = ssub.s32 1024, 1024
      %41 = vsyncadd [#allocation7], %s40
      %s42 = sshll.u32 [#allocation8], 4
      %s43 = int_to_ptr.vmem [resolvable:$true] %s42
      %48 = dma.hbm_to_vmem [thread:$0]  %s3, 1024, %s43, [#allocation7], 64, 64, 4
    $region17: #{tpu_custom_call.1} parent=1 // pred_fallthru
      _
    // Predicated region
    $region18: #{tpu_custom_call.1} parent=1 // pred_check
      _
    $region19: #{tpu_custom_call.1} parent=1 // pred_check_branch
      %50 = sbr.rel (0) target = $region21
    $region20: #{tpu_custom_call.1} parent=1 // pred_region
      _
    $region21: #{tpu_custom_call.1} parent=1 // pred_fallthru
      _
    // Predicated region
    $region22: #{tpu_custom_call.1} parent=1 // pred_check
      _
    $region23: #{tpu_custom_call.1} parent=1 // pred_check_branch
      %52 = sbr.rel (0) target = $region25
    $region24: #{tpu_custom_call.1} parent=1 // pred_region
      %53 = dma.done [#allocation4], 128
    $region25: #{tpu_custom_call.1} parent=1 // pred_fallthru
      _
    // Predicated region
    $region26: #{tpu_custom_call.1} parent=1 // pred_check
      _
    $region27: #{tpu_custom_call.1} parent=1 // pred_check_branch
      %55 = sbr.rel (0) target = $region29
    $region28: #{tpu_custom_call.1} parent=1 // pred_region
      %56 = dma.done [#allocation7], 256
    $region29: #{tpu_custom_call.1} parent=1 // pred_fallthru
      _
    // Predicated region
    $region30: #{tpu_custom_call.1} parent=1 // pred_check
      _
    $region31: #{tpu_custom_call.1} parent=1 // pred_check_branch
      %58 = sbr.rel (0) target = $region33
    $region32: #{tpu_custom_call.1} parent=1 // pred_region
      %59 = dma.done [#allocation7], 1024
    $region33: #{tpu_custom_call.1} parent=1 // pred_fallthru
      _
    %p61 = scmp.eq.s32.totalorder 0, 0
    // Predicated region
    $region34: #{tpu_custom_call.1} parent=1 // pred_check
      %p62 = pneg %p61
    $region35: #{tpu_custom_call.1} parent=1 // pred_check_branch
      %64 = sbr.rel (%p62) target = $region37
    $region36: #{tpu_custom_call.1} parent=1 // pred_region
      %65 = vst [vmem:[#allocation2] sm:$0xff] 0.0
    $region37: #{tpu_custom_call.1} parent=1 // pred_fallthru
      _
    %v66 = vld [vmem:[#allocation3] sm:$0xff]
    %v67 = vpack.c.bf16 %v66, %v66
    %v68 = vld [vmem:[#allocation6] sm:$0xf]
    %v69 = vld [vmem:[#allocation6 + $0x4] sm:$0xf]
    %v70 = vld [vmem:[#allocation6 + $0x8] sm:$0xf]
    %v71 = vld [vmem:[#allocation6 + $0xc] sm:$0xf]
    %v72 = vld [vmem:[%s2] sm:$0x1]
    %v74 = vlaneseq
    %v75 = vshrl.u32 %v74, 7
    %v76 = vsub.s32 0, %v75
    %v77 = vrot.slane %v72, %v76
    %v83 = vunpack.c.l.b16 %v68
    %v84 = vunpack.c.l.b16 %v69
    %v85 = vunpack.c.l.b16 %v70
    %v86 = vunpack.c.l.b16 %v71
    %v87 = vpack.c.b16 %v84, %v83
    %v88 = vpack.c.b16 %v86, %v85
    %vm91 = vcmask 261120
    %v93 = vsel %vm91, %v67, 0
    %95 = vmatprep.subr.bf16.mxu0 0
    %96 = vmatpush1.bf16.msra.mxu0 %v87
    %97 = vmatprep.subr.bf16.mxu0 0
    %98 = vmatpush1.bf16.msra.mxu0 %v88
    %99 = vmatprep.subr.bf16.mxu0 0
    %100 = vmatpush1.bf16.msra.mxu0 0
    %101 = vmatprep.subr.bf16.mxu0 0
    %102 = vmatpush1.bf16.msra.mxu0 0
    %103 = vmatprep.subr.bf16.mxu0 0
    %104 = vmatpush1.bf16.msra.mxu0 0
    %105 = vmatprep.subr.bf16.mxu0 0
    %106 = vmatpush1.bf16.msra.mxu0 0
    %107 = vmatprep.subr.bf16.mxu0 0
    %108 = vmatpush1.bf16.msra.mxu0 0
    %109 = vmatprep.subr.bf16.mxu0 0
    %110 = vmatpush1.bf16.msra.mxu0 0
    %111 = vmatprep.subr.bf16.mxu0 0
    %112 = vmatpush1.bf16.msra.mxu0 0
    %113 = vmatprep.subr.bf16.mxu0 0
    %114 = vmatpush1.bf16.msra.mxu0 0
    %115 = vmatprep.subr.bf16.mxu0 0
    %116 = vmatpush1.bf16.msra.mxu0 0
    %117 = vmatprep.subr.bf16.mxu0 0
    %118 = vmatpush1.bf16.msra.mxu0 0
    %119 = vmatprep.subr.bf16.mxu0 0
    %120 = vmatpush1.bf16.msra.mxu0 0
    %121 = vmatprep.subr.bf16.mxu0 0
    %122 = vmatpush1.bf16.msra.mxu0 0
    %123 = vmatprep.subr.bf16.mxu0 0
    %124 = vmatpush1.bf16.msra.mxu0 0
    %125 = vmatprep.subr.bf16.mxu0 0
    %126 = vmatpush1.bf16.msra.mxu0 0
    %127 = vmatprep.mubr.bf16.mxu0 0
    %128 = vmatmul.mubr.bf16.gmra.mrb[0].mxu0 %v93
    %v129 = vpop.f32.mrb[0].mxu0
    %v130 = vadd.f32 %v77, %v129
    %v131 = vpop.f32.mrb[0].mxu0
    %v132 = vpop.f32.mrb[0].mxu0
    %v133 = vpop.f32.mrb[0].mxu0
    %134 = vdwg.mxu0
    %v135 = vmax.f32 %v130, 0.0
    %v136 = vld [vmem:[#allocation2] sm:$0xff]
    %v137 = vpack.c.bf16 %v135, %v135
    %v138 = vld [vmem:[#allocation8] sm:$0xf]
    %v139 = vld [vmem:[#allocation8 + $0x4] sm:$0xf]
    %v140 = vld [vmem:[#allocation8 + $0x8] sm:$0xf]
    %v141 = vld [vmem:[#allocation8 + $0xc] sm:$0xf]
    %v142 = vld [vmem:[#allocation8 + $0x10] sm:$0xf]
    %v143 = vld [vmem:[#allocation8 + $0x14] sm:$0xf]
    %v144 = vld [vmem:[#allocation8 + $0x18] sm:$0xf]
    %v145 = vld [vmem:[#allocation8 + $0x1c] sm:$0xf]
    %v146 = vld [vmem:[#allocation8 + $0x20] sm:$0xf]
    %v147 = vld [vmem:[#allocation8 + $0x24] sm:$0xf]
    %v148 = vld [vmem:[#allocation8 + $0x28] sm:$0xf]
    %v149 = vld [vmem:[#allocation8 + $0x2c] sm:$0xf]
    %v150 = vld [vmem:[#allocation8 + $0x30] sm:$0xf]
    %v151 = vld [vmem:[#allocation8 + $0x34] sm:$0xf]
    %v152 = vld [vmem:[#allocation8 + $0x38] sm:$0xf]
    %v153 = vld [vmem:[#allocation8 + $0x3c] sm:$0xf]
    %v170 = vunpack.c.l.b16 %v138
    %v171 = vunpack.c.l.b16 %v139
    %v172 = vunpack.c.l.b16 %v140
    %v173 = vunpack.c.l.b16 %v141
    %v174 = vunpack.c.l.b16 %v142
    %v175 = vunpack.c.l.b16 %v143
    %v176 = vunpack.c.l.b16 %v144
    %v177 = vunpack.c.l.b16 %v145
    %v178 = vunpack.c.l.b16 %v146
    %v179 = vunpack.c.l.b16 %v147
    %v180 = vunpack.c.l.b16 %v148
    %v181 = vunpack.c.l.b16 %v149
    %v182 = vunpack.c.l.b16 %v150
    %v183 = vunpack.c.l.b16 %v151
    %v184 = vunpack.c.l.b16 %v152
    %v185 = vunpack.c.l.b16 %v153
    %v186 = vpack.c.b16 %v171, %v170
    %v187 = vpack.c.b16 %v173, %v172
    %v188 = vpack.c.b16 %v175, %v174
    %v189 = vpack.c.b16 %v177, %v176
    %v190 = vpack.c.b16 %v179, %v178
    %v191 = vpack.c.b16 %v181, %v180
    %v192 = vpack.c.b16 %v183, %v182
    %v193 = vpack.c.b16 %v185, %v184
    %202 = vmatprep.subr.bf16.mxu0 0
    %203 = vmatpush1.bf16.msra.mxu0 %v186
    %204 = vmatprep.subr.bf16.mxu0 0
    %205 = vmatpush1.bf16.msra.mxu0 %v187
    %206 = vmatprep.subr.bf16.mxu0 0
    %207 = vmatpush1.bf16.msra.mxu0 %v188
    %208 = vmatprep.subr.bf16.mxu0 0
    %209 = vmatpush1.bf16.msra.mxu0 %v189
    %210 = vmatprep.subr.bf16.mxu0 0
    %211 = vmatpush1.bf16.msra.mxu0 %v190
    %212 = vmatprep.subr.bf16.mxu0 0
    %213 = vmatpush1.bf16.msra.mxu0 %v191
    %214 = vmatprep.subr.bf16.mxu0 0
    %215 = vmatpush1.bf16.msra.mxu0 %v192
    %216 = vmatprep.subr.bf16.mxu0 0
    %217 = vmatpush1.bf16.msra.mxu0 %v193
    %218 = vmatprep.subr.bf16.mxu0 0
    %219 = vmatpush1.bf16.msra.mxu0 0
    %220 = vmatprep.subr.bf16.mxu0 0
    %221 = vmatpush1.bf16.msra.mxu0 0
    %222 = vmatprep.subr.bf16.mxu0 0
    %223 = vmatpush1.bf16.msra.mxu0 0
    %224 = vmatprep.subr.bf16.mxu0 0
    %225 = vmatpush1.bf16.msra.mxu0 0
    %226 = vmatprep.subr.bf16.mxu0 0
    %227 = vmatpush1.bf16.msra.mxu0 0
    %228 = vmatprep.subr.bf16.mxu0 0
    %229 = vmatpush1.bf16.msra.mxu0 0
    %230 = vmatprep.subr.bf16.mxu0 0
    %231 = vmatpush1.bf16.msra.mxu0 0
    %232 = vmatprep.subr.bf16.mxu0 0
    %233 = vmatpush1.bf16.msra.mxu0 0
    %234 = vmatprep.mubr.bf16.mxu0 0
    %235 = vmatmul.mubr.bf16.gmra.mrb[0].mxu0 %v137
    %v236 = vpop.f32.mrb[0].mxu0
    %v237 = vadd.f32 0.0, %v236
    %v238 = vpop.f32.mrb[0].mxu0
    %v239 = vpop.f32.mrb[0].mxu0
    %v240 = vpop.f32.mrb[0].mxu0
    %241 = vdwg.mxu0
    %v242 = vadd.f32 %v136, %v237
    %243 = vst [vmem:[#allocation2] sm:$0xff] %v242
    // Predicated region
    $region38: #{tpu_custom_call.1} parent=1 // pred_check
      %p244 = pneg %p61
    $region39: #{tpu_custom_call.1} parent=1 // pred_check_branch
      %246 = sbr.rel (%p244) target = $region41
    $region40: #{tpu_custom_call.1} parent=1 // pred_region
      %v247 = vld [vmem:[#allocation2] sm:$0xff]
      %v248 = vld [vmem:[%s4] sm:$0x1]
      %v250 = vlaneseq
      %v251 = vshrl.u32 %v250, 7
      %v252 = vsub.s32 0, %v251
      %v253 = vrot.slane %v248, %v252
      %v255 = vadd.f32 %v247, %v253
      %256 = vmax.xlane.f32.xlu0 %v255
      %v257 = vpop.xlane.xlu0 %256
      %v258 = vsub.f32 %v255, %v257
      %v259 = vmul.f32 %v258, 1.442695
      %v260 = vpow.pop %v259
      %261 = vadd.xlane.f32.xlu0 %v260
      %v262 = vpop.xlane.xlu0 %261
      %v263 = vrcp.pop %v262
      %v264 = vmul.f32 %v260, %v263
      %265 = vst [vmem:[#allocation9] sm:$0xff] %v264
    $region41: #{tpu_custom_call.1} parent=1 // pred_fallthru
      _
    // Predicated region
    $region42: #{tpu_custom_call.1} parent=1 // pred_check
      _
    $region43: #{tpu_custom_call.1} parent=1 // pred_check_branch
      %267 = sbr.rel (0) target = $region45
    $region44: #{tpu_custom_call.1} parent=1 // pred_region
      %s269 = ssub.s32 128, 128
      %270 = vsyncadd [#allocation5], %s269
      %s272 = sshll.u32 [#allocation9], 4
      %s273 = int_to_ptr.vmem [resolvable:$true] %s272
      %275 = dma.vmem_to_hbm [thread:$0]  %s273, 128, %s5, [#allocation5]
    $region45: #{tpu_custom_call.1} parent=1 // pred_fallthru
      _
    // Predicated region
    $region46: #{tpu_custom_call.1} parent=1 // pred_check
      _
    $region47: #{tpu_custom_call.1} parent=1 // pred_check_branch
      %277 = sbr.rel (0) target = $region49
    $region48: #{tpu_custom_call.1} parent=1 // pred_region
      %278 = dma.done [#allocation5], 128
    $region49: #{tpu_custom_call.1} parent=1 // pred_fallthru
      _
    %279 = vsyncpa [#allocation4], 1
    %280 = vsyncpa [#allocation7], 1
    %281 = vsyncpa [#allocation5], 1

// kernel: tpu_custom_call.1
$region0: #{tpu_custom_call.1}
  #allocation0 [shape = 'u32[]', space=smem, size = 0x4, offset = 0x4, fixed_abs, tag = 'smem constant byte address 0x4 - core index']
  #allocation1 [shape = 'u32[144,128]{1,0:T(1,128)}', space=vmem, size = 0x12000, scoped, tag = 'internal scratch']
  #allocation2 [shape = 'f32[8,128]{1,0:T(8,128)}', space=vmem, size = 0x1000, scoped, tag = 'scratch operand']
  %s0 = inlined_call_operand.hbm [shape: f32[8,32], index: 0, kind: input, shape index: {}]
  %s1 = inlined_call_operand.hbm [shape: bf16[32,128], index: 1, kind: input, shape index: {}]
  %s2 = inlined_call_operand.vmem [shape: f32[1,128], index: 2, kind: input, shape index: {}]
  %s3 = inlined_call_operand.hbm [shape: bf16[128,128], index: 3, kind: input, shape index: {}]
  %s4 = inlined_call_operand.vmem [shape: f32[1,128], index: 4, kind: input, shape index: {}]
  %s5 = inlined_call_operand.hbm [shape: f32[8,128], index: 5, kind: output, shape index: {}]
  %s6 = sld [smem:[#allocation0]]
  $region50: #{tpu_custom_call.1} parent=0
    _
  %s8 = ssub.s32 1, %s6
  %s9 = scalar_select 0, %s8, %s6
  $region1: #{tpu_custom_call.1} parent=0
    #allocation3 [shape = 'u8[4096]{0}', space=vmem, size = 0x1000, scoped, tag = 'input window, operand 0, single buffered']
    #allocation4 [shape = 's32[1]{0}', space=sflag, size = 0x4, scoped, tag = 'scoped memory for tpu_custom_call.1']
    #allocation5 [shape = 's32[1]{0}', space=sflag, size = 0x4, scoped, tag = 'scoped memory for tpu_custom_call.1']
    #allocation6 [shape = 'u8[8192]{0}', space=vmem, size = 0x2000, scoped, tag = 'input window, operand 1, single buffered']
    #allocation7 [shape = 's32[1]{0}', space=sflag, size = 0x4, scoped, tag = 'scoped memory for tpu_custom_call.1']
    #allocation8 [shape = 'u8[32768]{0}', space=vmem, size = 0x8000, scoped, tag = 'input window, operand 3, single buffered']
    #allocation9 [shape = 'u8[4096]{0}', space=vmem, size = 0x1000, scoped, tag = 'output window, operand 0, single buffered']
    %10 = vsyncpa [#allocation4], 0
    %11 = vsyncpa [#allocation7], 0
    %12 = vsyncpa [#allocation5], 0
    // Predicated region
    $region2: #{tpu_custom_call.1} parent=1 // pred_check
      _
    $region3: #{tpu_custom_call.1} parent=1 // pred_check_branch
      %14 = sbr.rel (0) target = $region5
    $region4: #{tpu_custom_call.1} parent=1 // pred_region
      %s16 = ssub.s32 128, 128
      %17 = vsyncadd [#allocation4], %s16
      %s19 = sshll.u32 [#allocation3], 4
      %s20 = int_to_ptr.vmem [resolvable:$true] %s19
      %22 = dma.hbm_to_vmem [thread:$0]  %s0, 128, %s20, [#allocation4]
    $region5: #{tpu_custom_call.1} parent=1 // pred_fallthru
      _
    // Predicated region
    $region6: #{tpu_custom_call.1} parent=1 // pred_check
      _
    $region7: #{tpu_custom_call.1} parent=1 // pred_check_branch
      %24 = sbr.rel (0) target = $region9
    $region8: #{tpu_custom_call.1} parent=1 // pred_region
      %s26 = ssub.s32 256, 256
      %27 = vsyncadd [#allocation7], %s26
      %s28 = sshll.u32 [#allocation6], 4
      %s29 = int_to_ptr.vmem [resolvable:$true] %s28
      %34 = dma.hbm_to_vmem [thread:$0]  %s1, 256, %s29, [#allocation7], 64, 64, 4
    $region9: #{tpu_custom_call.1} parent=1 // pred_fallthru
      _
    // Predicated region
    $region10: #{tpu_custom_call.1} parent=1 // pred_check
      _
    $region11: #{tpu_custom_call.1} parent=1 // pred_check_branch
      %36 = sbr.rel (0) target = $region13
    $region12: #{tpu_custom_call.1} parent=1 // pred_region
      _
    $region13: #{tpu_custom_call.1} parent=1 // pred_fallthru
      _
    // Predicated region
    $region14: #{tpu_custom_call.1} parent=1 // pred_check
      _
    $region15: #{tpu_custom_call.1} parent=1 // pred_check_branch
      %38 = sbr.rel (0) target = $region17
    $region16: #{tpu_custom_call.1} parent=1 // pred_region
      %s40 = ssub.s32 1024, 1024
      %41 = vsyncadd [#allocation7], %s40
      %s42 = sshll.u32 [#allocation8], 4
      %s43 = int_to_ptr.vmem [resolvable:$true] %s42
      %48 = dma.hbm_to_vmem [thread:$0]  %s3, 1024, %s43, [#allocation7], 64, 64, 4
    $region17: #{tpu_custom_call.1} parent=1 // pred_fallthru
      _
    // Predicated region
    $region18: #{tpu_custom_call.1} parent=1 // pred_check
      _
    $region19: #{tpu_custom_call.1} parent=1 // pred_check_branch
      %50 = sbr.rel (0) target = $region21
    $region20: #{tpu_custom_call.1} parent=1 // pred_region
      _
    $region21: #{tpu_custom_call.1} parent=1 // pred_fallthru
      _
    // Predicated region
    $region22: #{tpu_custom_call.1} parent=1 // pred_check
      _
    $region23: #{tpu_custom_call.1} parent=1 // pred_check_branch
      %52 = sbr.rel (0) target = $region25
    $region24: #{tpu_custom_call.1} parent=1 // pred_region
      %53 = dma.done [#allocation4], 128
    $region25: #{tpu_custom_call.1} parent=1 // pred_fallthru
      _
    // Predicated region
    $region26: #{tpu_custom_call.1} parent=1 // pred_check
      _
    $region27: #{tpu_custom_call.1} parent=1 // pred_check_branch
      %55 = sbr.rel (0) target = $region29
    $region28: #{tpu_custom_call.1} parent=1 // pred_region
      %56 = dma.done [#allocation7], 256
    $region29: #{tpu_custom_call.1} parent=1 // pred_fallthru
      _
    // Predicated region
    $region30: #{tpu_custom_call.1} parent=1 // pred_check
      _
    $region31: #{tpu_custom_call.1} parent=1 // pred_check_branch
      %58 = sbr.rel (0) target = $region33
    $region32: #{tpu_custom_call.1} parent=1 // pred_region
      %59 = dma.done [#allocation7], 1024
    $region33: #{tpu_custom_call.1} parent=1 // pred_fallthru
      _
    %p61 = scmp.eq.s32.totalorder 0, 0
    // Predicated region
    $region34: #{tpu_custom_call.1} parent=1 // pred_check
      %p62 = pneg %p61
    $region35: #{tpu_custom_call.1} parent=1 // pred_check_branch
      %64 = sbr.rel (%p62) target = $region37
    $region36: #{tpu_custom_call.1} parent=1 // pred_region
      %65 = vst [vmem:[#allocation2] sm:$0xff] 0.0
    $region37: #{tpu_custom_call.1} parent=1 // pred_fallthru
      _
    %v66 = vld [vmem:[#allocation3] sm:$0xff]
    %v67 = vpack.c.bf16 %v66, %v66
    %v68 = vld [vmem:[#allocation6] sm:$0xf]
    %v69 = vld [vmem:[#allocation6 + $0x4] sm:$0xf]
    %v70 = vld [vmem:[#allocation6 + $0x8] sm:$0xf]
    %v71 = vld [vmem:[#allocation6 + $0xc] sm:$0xf]
    %v72 = vld [vmem:[%s2] sm:$0x1]
    %v74 = vlaneseq
    %v75 = vshrl.u32 %v74, 7
    %v76 = vsub.s32 0, %v75
    %v77 = vrot.slane %v72, %v76
    %v83 = vunpack.c.l.b16 %v68
    %v84 = vunpack.c.l.b16 %v69
    %v85 = vunpack.c.l.b16 %v70
    %v86 = vunpack.c.l.b16 %v71
    %v87 = vpack.c.b16 %v84, %v83
    %v88 = vpack.c.b16 %v86, %v85
    %vm91 = vcmask 261120
    %v93 = vsel %vm91, %v67, 0
    %95 = vmatprep.subr.bf16.mxu0 0
    %96 = vmatpush1.bf16.msra.mxu0 %v87
    %97 = vmatprep.subr.bf16.mxu0 0
    %98 = vmatpush1.bf16.msra.mxu0 %v88
    %99 = vmatprep.subr.bf16.mxu0 0
    %100 = vmatpush1.bf16.msra.mxu0 0
    %101 = vmatprep.subr.bf16.mxu0 0
    %102 = vmatpush1.bf16.msra.mxu0 0
    %103 = vmatprep.subr.bf16.mxu0 0
    %104 = vmatpush1.bf16.msra.mxu0 0
    %105 = vmatprep.subr.bf16.mxu0 0
    %106 = vmatpush1.bf16.msra.mxu0 0
    %107 = vmatprep.subr.bf16.mxu0 0
    %108 = vmatpush1.bf16.msra.mxu0 0
    %109 = vmatprep.subr.bf16.mxu0 0
    %110 = vmatpush1.bf16.msra.mxu0 0
    %111 = vmatprep.subr.bf16.mxu0 0
    %112 = vmatpush1.bf16.msra.mxu0 0
    %113 = vmatprep.subr.bf16.mxu0 0
    %114 = vmatpush1.bf16.msra.mxu0 0
    %115 = vmatprep.subr.bf16.mxu0 0
    %116 = vmatpush1.bf16.msra.mxu0 0
    %117 = vmatprep.subr.bf16.mxu0 0
    %118 = vmatpush1.bf16.msra.mxu0 0
    %119 = vmatprep.subr.bf16.mxu0 0
    %120 = vmatpush1.bf16.msra.mxu0 0
    %121 = vmatprep.subr.bf16.mxu0 0
    %122 = vmatpush1.bf16.msra.mxu0 0
    %123 = vmatprep.subr.bf16.mxu0 0
    %124 = vmatpush1.bf16.msra.mxu0 0
    %125 = vmatprep.subr.bf16.mxu0 0
    %126 = vmatpush1.bf16.msra.mxu0 0
    %127 = vmatprep.mubr.bf16.mxu0 0
    %128 = vmatmul.mubr.bf16.gmra.mrb[0].mxu0 %v93
    %v129 = vpop.f32.mrb[0].mxu0
    %v130 = vadd.f32 %v77, %v129
    %v131 = vpop.f32.mrb[0].mxu0
    %v132 = vpop.f32.mrb[0].mxu0
    %v133 = vpop.f32.mrb[0].mxu0
    %134 = vdwg.mxu0
    %v135 = vmax.f32 %v130, 0.0
    %v136 = vld [vmem:[#allocation2] sm:$0xff]
    %v137 = vpack.c.bf16 %v135, %v135
    %v138 = vld [vmem:[#allocation8] sm:$0xf]
    %v139 = vld [vmem:[#allocation8 + $0x4] sm:$0xf]
    %v140 = vld [vmem:[#allocation8 + $0x8] sm:$0xf]
    %v141 = vld [vmem:[#allocation8 + $0xc] sm:$0xf]
    %v142 = vld [vmem:[#allocation8 + $0x10] sm:$0xf]
    %v143 = vld [vmem:[#allocation8 + $0x14] sm:$0xf]
    %v144 = vld [vmem:[#allocation8 + $0x18] sm:$0xf]
    %v145 = vld [vmem:[#allocation8 + $0x1c] sm:$0xf]
    %v146 = vld [vmem:[#allocation8 + $0x20] sm:$0xf]
    %v147 = vld [vmem:[#allocation8 + $0x24] sm:$0xf]
    %v148 = vld [vmem:[#allocation8 + $0x28] sm:$0xf]
    %v149 = vld [vmem:[#allocation8 + $0x2c] sm:$0xf]
    %v150 = vld [vmem:[#allocation8 + $0x30] sm:$0xf]
    %v151 = vld [vmem:[#allocation8 + $0x34] sm:$0xf]
    %v152 = vld [vmem:[#allocation8 + $0x38] sm:$0xf]
    %v153 = vld [vmem:[#allocation8 + $0x3c] sm:$0xf]
    %v170 = vunpack.c.l.b16 %v138
    %v171 = vunpack.c.l.b16 %v139
    %v172 = vunpack.c.l.b16 %v140
    %v173 = vunpack.c.l.b16 %v141
    %v174 = vunpack.c.l.b16 %v142
    %v175 = vunpack.c.l.b16 %v143
    %v176 = vunpack.c.l.b16 %v144
    %v177 = vunpack.c.l.b16 %v145
    %v178 = vunpack.c.l.b16 %v146
    %v179 = vunpack.c.l.b16 %v147
    %v180 = vunpack.c.l.b16 %v148
    %v181 = vunpack.c.l.b16 %v149
    %v182 = vunpack.c.l.b16 %v150
    %v183 = vunpack.c.l.b16 %v151
    %v184 = vunpack.c.l.b16 %v152
    %v185 = vunpack.c.l.b16 %v153
    %v186 = vpack.c.b16 %v171, %v170
    %v187 = vpack.c.b16 %v173, %v172
    %v188 = vpack.c.b16 %v175, %v174
    %v189 = vpack.c.b16 %v177, %v176
    %v190 = vpack.c.b16 %v179, %v178
    %v191 = vpack.c.b16 %v181, %v180
    %v192 = vpack.c.b16 %v183, %v182
    %v193 = vpack.c.b16 %v185, %v184
    %202 = vmatprep.subr.bf16.mxu0 0
    %203 = vmatpush1.bf16.msra.mxu0 %v186
    %204 = vmatprep.subr.bf16.mxu0 0
    %205 = vmatpush1.bf16.msra.mxu0 %v187
    %206 = vmatprep.subr.bf16.mxu0 0
    %207 = vmatpush1.bf16.msra.mxu0 %v188
    %208 = vmatprep.subr.bf16.mxu0 0
    %209 = vmatpush1.bf16.msra.mxu0 %v189
    %210 = vmatprep.subr.bf16.mxu0 0
    %211 = vmatpush1.bf16.msra.mxu0 %v190
    %212 = vmatprep.subr.bf16.mxu0 0
    %213 = vmatpush1.bf16.msra.mxu0 %v191
    %214 = vmatprep.subr.bf16.mxu0 0
    %215 = vmatpush1.bf16.msra.mxu0 %v192
    %216 = vmatprep.subr.bf16.mxu0 0
    %217 = vmatpush1.bf16.msra.mxu0 %v193
    %218 = vmatprep.subr.bf16.mxu0 0
    %219 = vmatpush1.bf16.msra.mxu0 0
    %220 = vmatprep.subr.bf16.mxu0 0
    %221 = vmatpush1.bf16.msra.mxu0 0
    %222 = vmatprep.subr.bf16.mxu0 0
    %223 = vmatpush1.bf16.msra.mxu0 0
    %224 = vmatprep.subr.bf16.mxu0 0
    %225 = vmatpush1.bf16.msra.mxu0 0
    %226 = vmatprep.subr.bf16.mxu0 0
    %227 = vmatpush1.bf16.msra.mxu0 0
    %228 = vmatprep.subr.bf16.mxu0 0
    %229 = vmatpush1.bf16.msra.mxu0 0
    %230 = vmatprep.subr.bf16.mxu0 0
    %231 = vmatpush1.bf16.msra.mxu0 0
    %232 = vmatprep.subr.bf16.mxu0 0
    %233 = vmatpush1.bf16.msra.mxu0 0
    %234 = vmatprep.mubr.bf16.mxu0 0
    %235 = vmatmul.mubr.bf16.gmra.mrb[0].mxu0 %v137
    %v236 = vpop.f32.mrb[0].mxu0
    %v237 = vadd.f32 0.0, %v236
    %v238 = vpop.f32.mrb[0].mxu0
    %v239 = vpop.f32.mrb[0].mxu0
    %v240 = vpop.f32.mrb[0].mxu0
    %241 = vdwg.mxu0
    %v242 = vadd.f32 %v136, %v237
    %243 = vst [vmem:[#allocation2] sm:$0xff] %v242
    // Predicated region
    $region38: #{tpu_custom_call.1} parent=1 // pred_check
      %p244 = pneg %p61
    $region39: #{tpu_custom_call.1} parent=1 // pred_check_branch
      %246 = sbr.rel (%p244) target = $region41
    $region40: #{tpu_custom_call.1} parent=1 // pred_region
      %v247 = vld [vmem:[#allocation2] sm:$0xff]
      %v248 = vld [vmem:[%s4] sm:$0x1]
      %v250 = vlaneseq
      %v251 = vshrl.u32 %v250, 7
      %v252 = vsub.s32 0, %v251
      %v253 = vrot.slane %v248, %v252
      %v255 = vadd.f32 %v247, %v253
      %256 = vmax.xlane.f32.xlu0 %v255
      %v257 = vpop.xlane.xlu0 %256
      %v258 = vsub.f32 %v255, %v257
      %v259 = vmul.f32 %v258, 1.442695
      %v260 = vpow.pop %v259
      %261 = vadd.xlane.f32.xlu0 %v260
      %v262 = vpop.xlane.xlu0 %261
      %v263 = vrcp.pop %v262
      %v264 = vmul.f32 %v260, %v263
      %265 = vst [vmem:[#allocation9] sm:$0xff] %v264
    $region41: #{tpu_custom_call.1} parent=1 // pred_fallthru
      _
    // Predicated region
    $region42: #{tpu_custom_call.1} parent=1 // pred_check
      _
    $region43: #{tpu_custom_call.1} parent=1 // pred_check_branch
      %267 = sbr.rel (0) target = $region45
    $region44: #{tpu_custom_call.1} parent=1 // pred_region
      %s269 = ssub.s32 128, 128
      %270 = vsyncadd [#allocation5], %s269
      %s272 = sshll.u32 [#allocation9], 4
      %s273 = int_to_ptr.vmem [resolvable:$true] %s272
      %275 = dma.vmem_to_hbm [thread:$0]  %s273, 128, %s5, [#allocation5]
    $region45: #{tpu_custom_call.1} parent=1 // pred_fallthru
      _
    // Predicated region
    $region46: #{tpu_custom_call.1} parent=1 // pred_check
      _
    $region47: #{tpu_custom_call.1} parent=1 // pred_check_branch
      %277 = sbr.rel (0) target = $region49
    $region48: #{tpu_custom_call.1} parent=1 // pred_region
      %278 = dma.done [#allocation5], 128
    $region49: #{tpu_custom_call.1} parent=1 // pred_fallthru
      _
    %279 = vsyncpa [#allocation4], 1
    %280 = vsyncpa [#allocation7], 1
    %281 = vsyncpa [#allocation5], 1

</llo_original>
